<compile_context>
chip_gen: v6e
topology: v6e:2x2x1
jax: 0.10.0
libtpu: 0.0.40
codegen_flags: <defaults>
</compile_context>

<pallas_src>
import numpy as np
import jax
import jax.numpy as jnp
from jax.experimental import pallas as pl
from jax.experimental.pallas import tpu as pltpu


# -----------------------------------------------------------------------------
# Configuration (mirrors network_cfg['parameters'] of the PyTorch module)
# -----------------------------------------------------------------------------
N_NETWORKS = 3
INPUT_SIZE = 16
HIDDEN = [32, 32]           # network_cfg['parameters']['layers'], non_linearity = relu
OUTPUT_SIZE = 8             # even; split into mean/var halves of OUTPUT_SIZE // 2
O2 = OUTPUT_SIZE // 2
BATCH = 8

NORMALIZE_CFG = {
    "x_min":   [-1.0, 0.0],
    "x_max":   [1.0, 2.0],
    "u":       [1.0, 1.0],
    "l":       [-1.0, 0.0],
    "lengths": [8, 8],       # sums to INPUT_SIZE
}


def normalize_affine(cfg, input_size):
    """Reproduce NormalizeLayer: per-feature a, b so that x_norm = a*x + b."""
    a = np.zeros((input_size,), dtype=np.float32)
    b = np.zeros((input_size,), dtype=np.float32)
    prev = 0
    for x_min, x_max, u, l, length in zip(cfg["x_min"], cfg["x_max"], cfg["u"],
                                          cfg["l"], cfg["lengths"]):
        for i in range(prev, prev + length):
            a[i] = (u - l) / (x_max - x_min)
            b[i] = l - x_min * (u - l) / (x_max - x_min)
        prev += length
    return a, b


def xavier_uniform(key, fan_in, fan_out):
    limit = float(np.sqrt(6.0 / (fan_in + fan_out)))
    return jax.random.uniform(key, (fan_in, fan_out), jnp.float32, -limit, limit)


# -----------------------------------------------------------------------------
# One-time parameter fusion (host / NumPy): fold normalize affine into layer 1,
# build block-diagonal ensemble weights, and fold the ensemble mean / per-member
# deviations into extra layer-3 output columns.
# -----------------------------------------------------------------------------
def fuse_ensemble_params(a_vec, b_vec, W1, B1, W2, B2, W3, B3):
    """Inputs:  W1:(N,D,H1) B1:(N,H1)  W2:(N,H1,H2) B2:(N,H2)  W3:(N,H2,O) B3:(N,O)

    Outputs (f32):
      W1c:(D, N*H1)     B1c:(1, N*H1)          -- normalize affine folded in
      W2c:(N*H1, N*H2)  B2c:(1, N*H2)          -- block-diagonal
      W3c:(N*H2, NOE)   B3c:(1, NOE)  with NOE = o2 + 2*N*o2 and columns
           [ mu | dev_0 .. dev_{N-1} | v_0 .. v_{N-1} ]
      where mu is the ensemble mean head and dev_i = mean-head_i - mu.
    """
    W1 = np.asarray(W1, np.float64); B1 = np.asarray(B1, np.float64)
    W2 = np.asarray(W2, np.float64); B2 = np.asarray(B2, np.float64)
    W3 = np.asarray(W3, np.float64); B3 = np.asarray(B3, np.float64)
    a_vec = np.asarray(a_vec, np.float64); b_vec = np.asarray(b_vec, np.float64)

    N, D, H1 = W1.shape
    H2 = W2.shape[2]
    O = W3.shape[2]
    o2 = O // 2

    # Layer 1: (a*x + b) @ W1 + b1 == x @ (a[:,None]*W1) + (b @ W1 + b1); concat members.
    W1f = a_vec[None, :, None] * W1                       # (N, D, H1)
    B1f = B1 + np.einsum("d,ndh->nh", b_vec, W1)          # (N, H1)
    W1c = W1f.transpose(1, 0, 2).reshape(D, N * H1)
    B1c = B1f.reshape(1, N * H1)

    # Layer 2: block-diagonal (N*H1, N*H2).
    W2c = np.zeros((N * H1, N * H2), np.float64)
    for i in range(N):
        W2c[i * H1:(i + 1) * H1, i * H2:(i + 1) * H2] = W2[i]
    B2c = B2.reshape(1, N * H2)

    # Layer 3: block-diagonal split into mean / raw-variance heads, then fold the
    # ensemble mean (mu) and per-member deviations (m_i - mu), which are linear,
    # into extra output columns so the MXU computes them directly.
    Wm = np.zeros((N * H2, N * o2), np.float64)   # stacked member mean heads
    Wv = np.zeros((N * H2, N * o2), np.float64)   # stacked member raw-variance heads
    Bm = np.zeros((N * o2,), np.float64)
    Bv = np.zeros((N * o2,), np.float64)
    for i in range(N):
        Wm[i * H2:(i + 1) * H2, i * o2:(i + 1) * o2] = W3[i][:, :o2]
        Wv[i * H2:(i + 1) * H2, i * o2:(i + 1) * o2] = W3[i][:, o2:]
        Bm[i * o2:(i + 1) * o2] = B3[i][:o2]
        Bv[i * o2:(i + 1) * o2] = B3[i][o2:]

    W_mu = Wm.reshape(N * H2, N, o2).mean(axis=1)        # (N*H2, o2)
    B_mu = Bm.reshape(N, o2).mean(axis=0)                # (o2,)
    W_dev = Wm - np.tile(W_mu, (1, N))                   # (N*H2, N*o2)
    B_dev = Bm - np.tile(B_mu, N)

    W3c = np.concatenate([W_mu, W_dev, Wv], axis=1)      # (N*H2, o2 + 2*N*o2)
    B3c = np.concatenate([B_mu, B_dev, Bv]).reshape(1, -1)

    return tuple(np.asarray(t, np.float32)
                 for t in (W1c, B1c, W2c, B2c, W3c, B3c))


# -----------------------------------------------------------------------------
# Pallas kernel + wrapper
# -----------------------------------------------------------------------------
def _pick_batch_tile(batch):
    """Batch tile: multiple of 8 (sublanes), capped at 256 (vreg pressure), and
    split into >= 2 grid steps when the batch allows it so both v7x TensorCores
    get work (one extra ~0.35us grid step on single-TC v5e/v6e is noise)."""
    if batch <= 8:
        return batch
    best = batch                                 # fallback: single full tile
    for tb in range(min(256, batch), 7, -8):
        if batch % tb == 0:
            if batch // tb >= 2:
                return tb
            best = min(best, tb)
    return best


def prob_ensemble_forward(x, W1c, B1c, W2c, B2c, W3c, B3c, *,
                          n_networks, output_size):
    """Fused ensemble forward. Returns (mean, aleatoric + epistemic), each (B, output_size//2)."""
    B, D = x.shape
    NH1 = W1c.shape[1]
    NH2 = W2c.shape[1]
    NOE = W3c.shape[1]                           # o2 + 2*N*o2  (mu | devs | raw vars)
    o2 = output_size // 2
    assert NOE == o2 * (1 + 2 * n_networks)

    TB = _pick_batch_tile(B)
    assert B % TB == 0

    OUT_PAD = max(128, ((output_size + 127) // 128) * 128)  # lane-dense output slab
    inv_n = np.float32(1.0 / n_networks)

    def kernel(x_ref, w1_ref, b1_ref, w2_ref, b2_ref, w3_ref, b3_ref, out_ref):
        # Layer 1 (normalize affine already folded into w1/b1) + ReLU. All f32.
        h = jnp.dot(x_ref[...], w1_ref[...],
                    preferred_element_type=jnp.float32) + b1_ref[...]
        h = jnp.maximum(h, 0.0)
        # Layer 2 (block-diagonal over ensemble members) + ReLU.
        h = jnp.dot(h, w2_ref[...],
                    preferred_element_type=jnp.float32) + b2_ref[...]
        h = jnp.maximum(h, 0.0)
        # Layer 3: columns are [mu | dev_0..dev_{N-1} | v_0..v_{N-1}]; the ensemble
        # mean and member deviations are linear, so the MXU produces them directly.
        y = jnp.dot(h, w3_ref[...],
                    preferred_element_type=jnp.float32) + b3_ref[...]

        mu = y[:, 0:o2]                                    # (TB, o2) ensemble mean
        d = y[:, o2:o2 + n_networks * o2]                  # (TB, N*o2) m_i - mu
        v = y[:, o2 + n_networks * o2:]                    # (TB, N*o2) raw variances

        # Softplus matching torch's log(1+exp) + inf-guard (identity for v > 20 to
        # within <= 1 ulp in f32); ONE EUP pass over all members at once.
        sp = jnp.where(v > 20.0, v,
                       jnp.log(1.0 + jnp.exp(jnp.minimum(v, 20.0))))
        t = (sp + d * d) * inv_n                           # aleatoric + epistemic parts
        var = t[:, 0:o2]
        for i in range(1, n_networks):                     # lane-group sum over members
            var = var + t[:, i * o2:(i + 1) * o2]

        # Lane-dense (TB, 128) output slab: mean in [:, :o2], total var in [:, o2:2*o2].
        out_ref[...] = jnp.zeros_like(out_ref)
        out_ref[:, 0:o2] = mu
        out_ref[:, o2:2 * o2] = var

    cost = pl.CostEstimate(
        flops=2 * B * (D * NH1 + NH1 * NH2 + NH2 * NOE),
        transcendentals=2 * B * n_networks * o2,           # exp + log per raw-variance elem
        bytes_accessed=4 * (B * D + D * NH1 + NH1 + NH1 * NH2 + NH2
                            + NH2 * NOE + NOE + B * OUT_PAD),
    )

    out = pl.pallas_call(
        kernel,
        out_shape=jax.ShapeDtypeStruct((B, OUT_PAD), jnp.float32),
        grid=(B // TB,),
        in_specs=[
            pl.BlockSpec((TB, D), lambda i: (i, 0)),       # x (batch-tiled)
            pl.BlockSpec((D, NH1), lambda i: (0, 0)),      # W1 fused (resident)
            pl.BlockSpec((1, NH1), lambda i: (0, 0)),      # b1 fused
            pl.BlockSpec((NH1, NH2), lambda i: (0, 0)),    # W2 block-diagonal
            pl.BlockSpec((1, NH2), lambda i: (0, 0)),      # b2
            pl.BlockSpec((NH2, NOE), lambda i: (0, 0)),    # W3 [mu | devs | raw vars]
            pl.BlockSpec((1, NOE), lambda i: (0, 0)),      # b3
        ],
        out_specs=pl.BlockSpec((TB, OUT_PAD), lambda i: (i, 0)),
        compiler_params=pltpu.CompilerParams(
            dimension_semantics=("parallel",)),
        cost_estimate=cost,
    )(x, W1c, B1c, W2c, B2c, W3c, B3c)

    return out[:, :o2], out[:, o2:2 * o2]


# -----------------------------------------------------------------------------
# Pure NumPy reference of the original (unfused) PyTorch forward
# -----------------------------------------------------------------------------
def reference_forward_np(x, a_vec, b_vec, W1, B1, W2, B2, W3, B3):
    x = np.asarray(x, np.float64)
    xn = a_vec[None, :].astype(np.float64) * x + b_vec[None, :].astype(np.float64)
    means, vars_ = [], []
    for i in range(W1.shape[0]):
        h = np.maximum(xn @ np.asarray(W1[i], np.float64) + np.asarray(B1[i], np.float64)[None, :], 0.0)
        h = np.maximum(h @ np.asarray(W2[i], np.float64) + np.asarray(B2[i], np.float64)[None, :], 0.0)
        out = h @ np.asarray(W3[i], np.float64) + np.asarray(B3[i], np.float64)[None, :]
        o2 = out.shape[1] // 2
        m, v = out[:, :o2], out[:, o2:]
        with np.errstate(over="ignore"):
            sp = np.log(1.0 + np.exp(v))
        sp = np.where(np.isinf(sp), v, sp)
        means.append(m)
        vars_.append(sp)
    means = np.stack(means, axis=1)
    vars_ = np.stack(vars_, axis=1)
    mu = means.mean(axis=1)
    aleatoric = vars_.mean(axis=1)
    epistemic = ((means - mu[:, None, :]) ** 2).mean(axis=1)
    return mu, aleatoric + epistemic


# -----------------------------------------------------------------------------
if __name__ == "__main__":
    key = jax.random.PRNGKey(0)
    keys = jax.random.split(key, 1 + 6 * N_NETWORKS)

    x = jax.random.normal(keys[0], (BATCH, INPUT_SIZE), jnp.float32)

    a_np, b_np = normalize_affine(NORMALIZE_CFG, INPUT_SIZE)

    # Deterministic xavier-uniform weights per ensemble member, small random biases.
    dims = [INPUT_SIZE] + HIDDEN + [OUTPUT_SIZE]
    W1, W2, W3, B1, B2, B3 = [], [], [], [], [], []
    for n in range(N_NETWORKS):
        k = keys[1 + 6 * n: 1 + 6 * (n + 1)]
        W1.append(xavier_uniform(k[0], dims[0], dims[1]))
        W2.append(xavier_uniform(k[1], dims[1], dims[2]))
        W3.append(xavier_uniform(k[2], dims[2], dims[3]))
        B1.append(jax.random.uniform(k[3], (dims[1],), jnp.float32, -0.1, 0.1))
        B2.append(jax.random.uniform(k[4], (dims[2],), jnp.float32, -0.1, 0.1))
        B3.append(jax.random.uniform(k[5], (dims[3],), jnp.float32, -0.1, 0.1))

    W1n = np.asarray(jnp.stack(W1)); W2n = np.asarray(jnp.stack(W2)); W3n = np.asarray(jnp.stack(W3))
    B1n = np.asarray(jnp.stack(B1)); B2n = np.asarray(jnp.stack(B2)); B3n = np.asarray(jnp.stack(B3))

    # One-time fusion: normalize fold + block-diagonal ensemble + mu/deviation columns.
    W1c, B1c, W2c, B2c, W3c, B3c = fuse_ensemble_params(
        a_np, b_np, W1n, B1n, W2n, B2n, W3n, B3n)
    fused = tuple(jnp.asarray(t) for t in (W1c, B1c, W2c, B2c, W3c, B3c))

    mean_out, var_out = prob_ensemble_forward(
        x, *fused, n_networks=N_NETWORKS, output_size=OUTPUT_SIZE)
    jax.block_until_ready((mean_out, var_out))

    mean_ref, var_ref = reference_forward_np(
        np.asarray(x), a_np, b_np, W1n, B1n, W2n, B2n, W3n, B3n)

    assert mean_out.shape == (BATCH, O2) and var_out.shape == (BATCH, O2)
    np.testing.assert_allclose(np.asarray(mean_out), mean_ref, rtol=2e-2, atol=2e-2)
    np.testing.assert_allclose(np.asarray(var_out), var_ref, rtol=2e-2, atol=2e-2)

    # TODO(synk): training-side members (fit/optimizer/scheduler/GaussianNLLLoss) are
    # out of scope for this forward-pass kernel.
    print("KERNEL_OK")
</pallas_src>

<mosaic_0001>
module attributes {stable_mosaic.version = 11 : i64} {
  func.func @kernel(%arg0: i32, %arg1: memref<8x16xf32, #tpu.memory_space<vmem>>, %arg2: memref<16x96xf32, #tpu.memory_space<vmem>>, %arg3: memref<1x96xf32, #tpu.memory_space<vmem>>, %arg4: memref<96x96xf32, #tpu.memory_space<vmem>>, %arg5: memref<1x96xf32, #tpu.memory_space<vmem>>, %arg6: memref<96x28xf32, #tpu.memory_space<vmem>>, %arg7: memref<1x28xf32, #tpu.memory_space<vmem>>, %arg8: memref<8x128xf32, #tpu.memory_space<vmem>>) attributes {dimension_semantics = [#tpu.dimension_semantics<parallel>], iteration_bounds = array<i64: 1>, scalar_prefetch = 0 : i64, scratch_operands = 0 : i64, tpu.core_type = #tpu.core_type<tc>, window_params = [{transform_indices = @transform_0, window_bounds = array<i64: 8, 16>}, {pipeline_mode = #tpu.pipeline_mode<synchronous>, transform_indices = @transform_1, window_bounds = array<i64: 16, 96>}, {pipeline_mode = #tpu.pipeline_mode<synchronous>, transform_indices = @transform_2, window_bounds = array<i64: 1, 96>}, {pipeline_mode = #tpu.pipeline_mode<synchronous>, transform_indices = @transform_3, window_bounds = array<i64: 96, 96>}, {pipeline_mode = #tpu.pipeline_mode<synchronous>, transform_indices = @transform_4, window_bounds = array<i64: 1, 96>}, {pipeline_mode = #tpu.pipeline_mode<synchronous>, transform_indices = @transform_5, window_bounds = array<i64: 96, 28>}, {pipeline_mode = #tpu.pipeline_mode<synchronous>, transform_indices = @transform_6, window_bounds = array<i64: 1, 28>}, {transform_indices = @transform_7, window_bounds = array<i64: 8, 128>}]} {
    %c0 = arith.constant 0 : index
    %c0_0 = arith.constant 0 : index
    %0 = vector.load %arg1[%c0, %c0_0] : memref<8x16xf32, #tpu.memory_space<vmem>>, vector<8x16xf32>
    %c0_1 = arith.constant 0 : index
    %c0_2 = arith.constant 0 : index
    %1 = vector.load %arg2[%c0_1, %c0_2] : memref<16x96xf32, #tpu.memory_space<vmem>>, vector<16x96xf32>
    %cst = arith.constant dense<0.000000e+00> : vector<8x96xf32>
    %2 = tpu.matmul %0, %1, %cst {dimension_numbers = #tpu.dot_dimension_numbers<[1], [0], [0], [1], [0, 0, 1, 1], [], []>} : vector<8x16xf32>, vector<16x96xf32>, vector<8x96xf32> -> vector<8x96xf32>
    %c0_3 = arith.constant 0 : index
    %c0_4 = arith.constant 0 : index
    %3 = vector.load %arg3[%c0_3, %c0_4] : memref<1x96xf32, #tpu.memory_space<vmem>>, vector<1x96xf32>
    %4 = vector.broadcast %3 : vector<1x96xf32> to vector<8x96xf32>
    %5 = arith.addf %2, %4 : vector<8x96xf32>
    %cst_5 = arith.constant 0.000000e+00 : f32
    %6 = vector.broadcast %cst_5 : f32 to vector<8x96xf32>
    %7 = arith.maximumf %5, %6 : vector<8x96xf32>
    %c0_6 = arith.constant 0 : index
    %c0_7 = arith.constant 0 : index
    %8 = vector.load %arg4[%c0_6, %c0_7] : memref<96x96xf32, #tpu.memory_space<vmem>>, vector<96x96xf32>
    %cst_8 = arith.constant dense<0.000000e+00> : vector<8x96xf32>
    %9 = tpu.matmul %7, %8, %cst_8 {dimension_numbers = #tpu.dot_dimension_numbers<[1], [0], [0], [1], [0, 0, 1, 1], [], []>} : vector<8x96xf32>, vector<96x96xf32>, vector<8x96xf32> -> vector<8x96xf32>
    %c0_9 = arith.constant 0 : index
    %c0_10 = arith.constant 0 : index
    %10 = vector.load %arg5[%c0_9, %c0_10] : memref<1x96xf32, #tpu.memory_space<vmem>>, vector<1x96xf32>
    %11 = vector.broadcast %10 : vector<1x96xf32> to vector<8x96xf32>
    %12 = arith.addf %9, %11 : vector<8x96xf32>
    %cst_11 = arith.constant 0.000000e+00 : f32
    %13 = vector.broadcast %cst_11 : f32 to vector<8x96xf32>
    %14 = arith.maximumf %12, %13 : vector<8x96xf32>
    %c0_12 = arith.constant 0 : index
    %c0_13 = arith.constant 0 : index
    %15 = vector.load %arg6[%c0_12, %c0_13] : memref<96x28xf32, #tpu.memory_space<vmem>>, vector<96x28xf32>
    %cst_14 = arith.constant dense<0.000000e+00> : vector<8x28xf32>
    %16 = tpu.matmul %14, %15, %cst_14 {dimension_numbers = #tpu.dot_dimension_numbers<[1], [0], [0], [1], [0, 0, 1, 1], [], []>} : vector<8x96xf32>, vector<96x28xf32>, vector<8x28xf32> -> vector<8x28xf32>
    %c0_15 = arith.constant 0 : index
    %c0_16 = arith.constant 0 : index
    %17 = vector.load %arg7[%c0_15, %c0_16] : memref<1x28xf32, #tpu.memory_space<vmem>>, vector<1x28xf32>
    %18 = vector.broadcast %17 : vector<1x28xf32> to vector<8x28xf32>
    %19 = arith.addf %16, %18 : vector<8x28xf32>
    %20 = vector.extract_strided_slice %19 {offsets = [0, 0], sizes = [8, 4], strides = [1, 1]} : vector<8x28xf32> to vector<8x4xf32>
    %21 = vector.extract_strided_slice %19 {offsets = [0, 4], sizes = [8, 12], strides = [1, 1]} : vector<8x28xf32> to vector<8x12xf32>
    %22 = vector.extract_strided_slice %19 {offsets = [0, 16], sizes = [8, 12], strides = [1, 1]} : vector<8x28xf32> to vector<8x12xf32>
    %cst_17 = arith.constant 2.000000e+01 : f32
    %23 = vector.broadcast %cst_17 : f32 to vector<8x12xf32>
    %24 = arith.cmpf ogt, %22, %23 : vector<8x12xf32>
    %cst_18 = arith.constant 2.000000e+01 : f32
    %25 = vector.broadcast %cst_18 : f32 to vector<8x12xf32>
    %26 = arith.minimumf %22, %25 : vector<8x12xf32>
    %27 = math.exp %26 : vector<8x12xf32>
    %cst_19 = arith.constant 1.000000e+00 : f32
    %28 = vector.broadcast %cst_19 : f32 to vector<8x12xf32>
    %29 = arith.addf %28, %27 : vector<8x12xf32>
    %30 = math.log %29 : vector<8x12xf32>
    %31 = arith.select %24, %22, %30 : vector<8x12xi1>, vector<8x12xf32>
    %32 = arith.mulf %21, %21 : vector<8x12xf32>
    %33 = arith.addf %31, %32 : vector<8x12xf32>
    %cst_20 = arith.constant 0.333333343 : f32
    %34 = vector.broadcast %cst_20 : f32 to vector<8x12xf32>
    %35 = arith.mulf %33, %34 : vector<8x12xf32>
    %36 = vector.extract_strided_slice %35 {offsets = [0, 0], sizes = [8, 4], strides = [1, 1]} : vector<8x12xf32> to vector<8x4xf32>
    %37 = vector.extract_strided_slice %35 {offsets = [0, 4], sizes = [8, 4], strides = [1, 1]} : vector<8x12xf32> to vector<8x4xf32>
    %38 = arith.addf %36, %37 : vector<8x4xf32>
    %39 = vector.extract_strided_slice %35 {offsets = [0, 8], sizes = [8, 4], strides = [1, 1]} : vector<8x12xf32> to vector<8x4xf32>
    %40 = arith.addf %38, %39 : vector<8x4xf32>
    %cst_21 = arith.constant 0.000000e+00 : f32
    %41 = vector.broadcast %cst_21 : f32 to vector<8x128xf32>
    %c0_22 = arith.constant 0 : index
    %c0_23 = arith.constant 0 : index
    %42 = vector.load %arg8[%c0_22, %c0_23] : memref<8x128xf32, #tpu.memory_space<vmem>>, vector<8x128xf32>
    tpu.vector_store %arg8[%c0_22, %c0_23], %41 {strides = array<i32>} : memref<8x128xf32, #tpu.memory_space<vmem>>, vector<8x128xf32>,
    %c0_24 = arith.constant 0 : index
    %c0_25 = arith.constant 0 : index
    %43 = vector.load %arg8[%c0_24, %c0_25] : memref<8x128xf32, #tpu.memory_space<vmem>>, vector<8x4xf32>
    tpu.vector_store %arg8[%c0_24, %c0_25], %20 {strides = array<i32>} : memref<8x128xf32, #tpu.memory_space<vmem>>, vector<8x4xf32>,
    %c0_26 = arith.constant 0 : index
    %c4 = arith.constant 4 : index
    %44 = vector.load %arg8[%c0_26, %c4] : memref<8x128xf32, #tpu.memory_space<vmem>>, vector<8x4xf32>
    tpu.vector_store %arg8[%c0_26, %c4], %40 {strides = array<i32>} : memref<8x128xf32, #tpu.memory_space<vmem>>, vector<8x4xf32>,
    return
  }
  func.func @transform_0(%arg0: i32) -> (i32, i32) {
    %c0_i32 = arith.constant 0 : i32
    %c0_i32_0 = arith.constant 0 : i32
    return %arg0, %c0_i32 : i32, i32
  }
  func.func @transform_1(%arg0: i32) -> (i32, i32) {
    %c0_i32 = arith.constant 0 : i32
    %c0_i32_0 = arith.constant 0 : i32
    %c0_i32_1 = arith.constant 0 : i32
    return %c0_i32, %c0_i32_0 : i32, i32
  }
  func.func @transform_2(%arg0: i32) -> (i32, i32) {
    %c0_i32 = arith.constant 0 : i32
    %c0_i32_0 = arith.constant 0 : i32
    %c0_i32_1 = arith.constant 0 : i32
    return %c0_i32, %c0_i32_0 : i32, i32
  }
  func.func @transform_3(%arg0: i32) -> (i32, i32) {
    %c0_i32 = arith.constant 0 : i32
    %c0_i32_0 = arith.constant 0 : i32
    %c0_i32_1 = arith.constant 0 : i32
    return %c0_i32, %c0_i32_0 : i32, i32
  }
  func.func @transform_4(%arg0: i32) -> (i32, i32) {
    %c0_i32 = arith.constant 0 : i32
    %c0_i32_0 = arith.constant 0 : i32
    %c0_i32_1 = arith.constant 0 : i32
    return %c0_i32, %c0_i32_0 : i32, i32
  }
  func.func @transform_5(%arg0: i32) -> (i32, i32) {
    %c0_i32 = arith.constant 0 : i32
    %c0_i32_0 = arith.constant 0 : i32
    %c0_i32_1 = arith.constant 0 : i32
    return %c0_i32, %c0_i32_0 : i32, i32
  }
  func.func @transform_6(%arg0: i32) -> (i32, i32) {
    %c0_i32 = arith.constant 0 : i32
    %c0_i32_0 = arith.constant 0 : i32
    %c0_i32_1 = arith.constant 0 : i32
    return %c0_i32, %c0_i32_0 : i32, i32
  }
  func.func @transform_7(%arg0: i32) -> (i32, i32) {
    %c0_i32 = arith.constant 0 : i32
    %c0_i32_0 = arith.constant 0 : i32
    return %arg0, %c0_i32 : i32, i32
  }
}

</mosaic_0001>

<llo_original>
// kernel: tpu_custom_call.1
$region0: #{tpu_custom_call.1}
  #allocation0 [shape = 'u32[]', space=smem, size = 0x4, offset = 0x4, fixed_abs, tag = 'smem constant byte address 0x4 - core index']
  #allocation1 [shape = 'u32[144,128]{1,0:T(1,128)}', space=vmem, size = 0x12000, scoped, tag = 'internal scratch']
  %s0 = inlined_call_operand.vmem [shape: f32[8,16], index: 0, kind: input, shape index: {}]
  %s1 = inlined_call_operand.vmem [shape: f32[16,96], index: 1, kind: input, shape index: {}]
  %s2 = inlined_call_operand.vmem [shape: f32[1,96], index: 2, kind: input, shape index: {}]
  %s3 = inlined_call_operand.vmem [shape: f32[96,96], index: 3, kind: input, shape index: {}]
  %s4 = inlined_call_operand.vmem [shape: f32[1,96], index: 4, kind: input, shape index: {}]
  %s5 = inlined_call_operand.vmem [shape: f32[96,28], index: 5, kind: input, shape index: {}]
  %s6 = inlined_call_operand.vmem [shape: f32[1,28], index: 6, kind: input, shape index: {}]
  %s7 = inlined_call_operand.hbm [shape: f32[8,128], index: 7, kind: output, shape index: {}]
  %s8 = sld [smem:[#allocation0]]
  $region38: #{tpu_custom_call.1} parent=0
    _
  %s10 = ssub.s32 1, %s8
  %s11 = scalar_select 0, %s10, %s8
  $region1: #{tpu_custom_call.1} parent=0
    #allocation2 [shape = 'u8[4096]{0}', space=vmem, size = 0x1000, scoped, tag = 'output window, operand 0, single buffered']
    #allocation3 [shape = 's32[1]{0}', space=sflag, size = 0x4, scoped, tag = 'scoped memory for tpu_custom_call.1']
    %12 = vsyncpa [#allocation3], 0
    // Predicated region
    $region2: #{tpu_custom_call.1} parent=1 // pred_check
      _
    $region3: #{tpu_custom_call.1} parent=1 // pred_check_branch
      %14 = sbr.rel (0) target = $region5
    $region4: #{tpu_custom_call.1} parent=1 // pred_region
      _
    $region5: #{tpu_custom_call.1} parent=1 // pred_fallthru
      _
    // Predicated region
    $region6: #{tpu_custom_call.1} parent=1 // pred_check
      _
    $region7: #{tpu_custom_call.1} parent=1 // pred_check_branch
      %16 = sbr.rel (0) target = $region9
    $region8: #{tpu_custom_call.1} parent=1 // pred_region
      _
    $region9: #{tpu_custom_call.1} parent=1 // pred_fallthru
      _
    // Predicated region
    $region10: #{tpu_custom_call.1} parent=1 // pred_check
      _
    $region11: #{tpu_custom_call.1} parent=1 // pred_check_branch
      %18 = sbr.rel (0) target = $region13
    $region12: #{tpu_custom_call.1} parent=1 // pred_region
      _
    $region13: #{tpu_custom_call.1} parent=1 // pred_fallthru
      _
    // Predicated region
    $region14: #{tpu_custom_call.1} parent=1 // pred_check
      _
    $region15: #{tpu_custom_call.1} parent=1 // pred_check_branch
      %20 = sbr.rel (0) target = $region17
    $region16: #{tpu_custom_call.1} parent=1 // pred_region
      _
    $region17: #{tpu_custom_call.1} parent=1 // pred_fallthru
      _
    // Predicated region
    $region18: #{tpu_custom_call.1} parent=1 // pred_check
      _
    $region19: #{tpu_custom_call.1} parent=1 // pred_check_branch
      %22 = sbr.rel (0) target = $region21
    $region20: #{tpu_custom_call.1} parent=1 // pred_region
      _
    $region21: #{tpu_custom_call.1} parent=1 // pred_fallthru
      _
    // Predicated region
    $region22: #{tpu_custom_call.1} parent=1 // pred_check
      _
    $region23: #{tpu_custom_call.1} parent=1 // pred_check_branch
      %24 = sbr.rel (0) target = $region25
    $region24: #{tpu_custom_call.1} parent=1 // pred_region
      _
    $region25: #{tpu_custom_call.1} parent=1 // pred_fallthru
      _
    // Predicated region
    $region26: #{tpu_custom_call.1} parent=1 // pred_check
      _
    $region27: #{tpu_custom_call.1} parent=1 // pred_check_branch
      %26 = sbr.rel (0) target = $region29
    $region28: #{tpu_custom_call.1} parent=1 // pred_region
      _
    $region29: #{tpu_custom_call.1} parent=1 // pred_fallthru
      _
    %v27 = vld [vmem:[%s0] sm:$0xff]
    %v28 = vld [vmem:[%s1] sm:$0xff]
    %v29 = vld [vmem:[%s1 + $0x8] sm:$0xff]
    %v30 = vld [vmem:[%s2] sm:$0x1]
    %v32 = vlaneseq
    %v33 = vshrl.u32 %v32, 7
    %v34 = vsub.s32 0, %v33
    %v35 = vrot.slane %v30, %v34
    %vm37 = vcmask 130048
    %v39 = vsel %vm37, %v27, 0
    %41 = vmatprep.subr.mxu0 0.0
    %42 = vmatpush1.msra.mxu0 0.0
    %43 = vmatprep.subr.mxu0 0.0
    %44 = vmatpush1.msra.mxu0 0.0
    %45 = vmatprep.subr.mxu0 0.0
    %46 = vmatpush1.msra.mxu0 0.0
    %47 = vmatprep.subr.mxu0 0.0
    %48 = vmatpush1.msra.mxu0 0.0
    %49 = vmatprep.subr.mxu0 0.0
    %50 = vmatpush1.msra.mxu0 0.0
    %51 = vmatprep.subr.mxu0 0.0
    %52 = vmatpush1.msra.mxu0 0.0
    %53 = vmatprep.subr.mxu0 0.0
    %54 = vmatpush1.msra.mxu0 0.0
    %55 = vmatprep.subr.mxu0 0.0
    %56 = vmatpush1.msra.mxu0 0.0
    %57 = vmatprep.subr.mxu0 0.0
    %58 = vmatpush1.msra.mxu0 0.0
    %59 = vmatprep.subr.mxu0 0.0
    %60 = vmatpush1.msra.mxu0 0.0
    %61 = vmatprep.subr.mxu0 0.0
    %62 = vmatpush1.msra.mxu0 0.0
    %63 = vmatprep.subr.mxu0 0.0
    %64 = vmatpush1.msra.mxu0 0.0
    %65 = vmatprep.subr.mxu0 0.0
    %66 = vmatpush1.msra.mxu0 0.0
    %67 = vmatprep.subr.mxu0 0.0
    %68 = vmatpush1.msra.mxu0 0.0
    %69 = vmatprep.subr.mxu0 0.0
    %70 = vmatpush1.msra.mxu0 %v29
    %71 = vmatprep.subr.mxu0 0.0
    %72 = vmatpush1.msra.mxu0 %v28
    %73 = vmatprep.subr.mxu0 0.0
    %74 = vmatpush2.msra.mxu0 0.0
    %75 = vmatprep.subr.mxu0 0.0
    %76 = vmatpush2.msra.mxu0 0.0
    %77 = vmatprep.subr.mxu0 0.0
    %78 = vmatpush2.msra.mxu0 0.0
    %79 = vmatprep.subr.mxu0 0.0
    %80 = vmatpush2.msra.mxu0 0.0
    %81 = vmatprep.subr.mxu0 0.0
    %82 = vmatpush2.msra.mxu0 0.0
    %83 = vmatprep.subr.mxu0 0.0
    %84 = vmatpush2.msra.mxu0 0.0
    %85 = vmatprep.subr.mxu0 0.0
    %86 = vmatpush2.msra.mxu0 0.0
    %87 = vmatprep.subr.mxu0 0.0
    %88 = vmatpush2.msra.mxu0 0.0
    %89 = vmatprep.subr.mxu0 0.0
    %90 = vmatpush2.msra.mxu0 0.0
    %91 = vmatprep.subr.mxu0 0.0
    %92 = vmatpush2.msra.mxu0 0.0
    %93 = vmatprep.subr.mxu0 0.0
    %94 = vmatpush2.msra.mxu0 0.0
    %95 = vmatprep.subr.mxu0 0.0
    %96 = vmatpush2.msra.mxu0 0.0
    %97 = vmatprep.subr.mxu0 0.0
    %98 = vmatpush2.msra.mxu0 0.0
    %99 = vmatprep.subr.mxu0 0.0
    %100 = vmatpush2.msra.mxu0 0.0
    %101 = vmatprep.subr.mxu0 0.0
    %102 = vmatpush2.msra.mxu0 0.0
    %103 = vmatprep.subr.mxu0 0.0
    %104 = vmatpush2.msra.mxu0 0.0
    %105 = vmatprep.mubr.f32.mxu0 0.0
    %106 = vmatmul.mubr.f32.gmra.mxu0 %v39
    %v107 = vpop.f32.mrf.mxu0
    %v108 = vadd.f32 %v35, %v107
    %v109 = vpop.f32.mrf.mxu0
    %110 = vdwg.mxu0
    %v111 = vmax.f32 %v108, 0.0
    %v112 = vld [vmem:[%s3] sm:$0xff]
    %v113 = vld [vmem:[%s3 + $0x8] sm:$0xff]
    %v114 = vld [vmem:[%s3 + $0x10] sm:$0xff]
    %v115 = vld [vmem:[%s3 + $0x18] sm:$0xff]
    %v116 = vld [vmem:[%s3 + $0x20] sm:$0xff]
    %v117 = vld [vmem:[%s3 + $0x28] sm:$0xff]
    %v118 = vld [vmem:[%s3 + $0x30] sm:$0xff]
    %v119 = vld [vmem:[%s3 + $0x38] sm:$0xff]
    %v120 = vld [vmem:[%s3 + $0x40] sm:$0xff]
    %v121 = vld [vmem:[%s3 + $0x48] sm:$0xff]
    %v122 = vld [vmem:[%s3 + $0x50] sm:$0xff]
    %v123 = vld [vmem:[%s3 + $0x58] sm:$0xff]
    %v124 = vld [vmem:[%s4] sm:$0x1]
    %v126 = vlaneseq
    %v127 = vshrl.u32 %v126, 7
    %v128 = vsub.s32 0, %v127
    %v129 = vrot.slane %v124, %v128
    %vm131 = vcmask 785408
    %v133 = vsel %vm131, %v111, 0
    %135 = vmatprep.subr.mxu0 0.0
    %136 = vmatpush1.msra.mxu0 0.0
    %137 = vmatprep.subr.mxu0 0.0
    %138 = vmatpush1.msra.mxu0 0.0
    %139 = vmatprep.subr.mxu0 0.0
    %140 = vmatpush1.msra.mxu0 0.0
    %141 = vmatprep.subr.mxu0 0.0
    %142 = vmatpush1.msra.mxu0 0.0
    %143 = vmatprep.subr.mxu0 0.0
    %144 = vmatpush1.msra.mxu0 %v123
    %145 = vmatprep.subr.mxu0 0.0
    %146 = vmatpush1.msra.mxu0 %v122
    %147 = vmatprep.subr.mxu0 0.0
    %148 = vmatpush1.msra.mxu0 %v121
    %149 = vmatprep.subr.mxu0 0.0
    %150 = vmatpush1.msra.mxu0 %v120
    %151 = vmatprep.subr.mxu0 0.0
    %152 = vmatpush1.msra.mxu0 %v119
    %153 = vmatprep.subr.mxu0 0.0
    %154 = vmatpush1.msra.mxu0 %v118
    %155 = vmatprep.subr.mxu0 0.0
    %156 = vmatpush1.msra.mxu0 %v117
    %157 = vmatprep.subr.mxu0 0.0
    %158 = vmatpush1.msra.mxu0 %v116
    %159 = vmatprep.subr.mxu0 0.0
    %160 = vmatpush1.msra.mxu0 %v115
    %161 = vmatprep.subr.mxu0 0.0
    %162 = vmatpush1.msra.mxu0 %v114
    %163 = vmatprep.subr.mxu0 0.0
    %164 = vmatpush1.msra.mxu0 %v113
    %165 = vmatprep.subr.mxu0 0.0
    %166 = vmatpush1.msra.mxu0 %v112
    %167 = vmatprep.subr.mxu0 0.0
    %168 = vmatpush2.msra.mxu0 0.0
    %169 = vmatprep.subr.mxu0 0.0
    %170 = vmatpush2.msra.mxu0 0.0
    %171 = vmatprep.subr.mxu0 0.0
    %172 = vmatpush2.msra.mxu0 0.0
    %173 = vmatprep.subr.mxu0 0.0
    %174 = vmatpush2.msra.mxu0 0.0
    %175 = vmatprep.subr.mxu0 0.0
    %176 = vmatpush2.msra.mxu0 0.0
    %177 = vmatprep.subr.mxu0 0.0
    %178 = vmatpush2.msra.mxu0 0.0
    %179 = vmatprep.subr.mxu0 0.0
    %180 = vmatpush2.msra.mxu0 0.0
    %181 = vmatprep.subr.mxu0 0.0
    %182 = vmatpush2.msra.mxu0 0.0
    %183 = vmatprep.subr.mxu0 0.0
    %184 = vmatpush2.msra.mxu0 0.0
    %185 = vmatprep.subr.mxu0 0.0
    %186 = vmatpush2.msra.mxu0 0.0
    %187 = vmatprep.subr.mxu0 0.0
    %188 = vmatpush2.msra.mxu0 0.0
    %189 = vmatprep.subr.mxu0 0.0
    %190 = vmatpush2.msra.mxu0 0.0
    %191 = vmatprep.subr.mxu0 0.0
    %192 = vmatpush2.msra.mxu0 0.0
    %193 = vmatprep.subr.mxu0 0.0
    %194 = vmatpush2.msra.mxu0 0.0
    %195 = vmatprep.subr.mxu0 0.0
    %196 = vmatpush2.msra.mxu0 0.0
    %197 = vmatprep.subr.mxu0 0.0
    %198 = vmatpush2.msra.mxu0 0.0
    %199 = vmatprep.mubr.f32.mxu0 0.0
    %200 = vmatmul.mubr.f32.gmra.mxu0 %v133
    %v201 = vpop.f32.mrf.mxu0
    %v202 = vadd.f32 %v129, %v201
    %v203 = vpop.f32.mrf.mxu0
    %204 = vdwg.mxu0
    %v205 = vmax.f32 %v202, 0.0
    %v206 = vld [vmem:[%s5] sm:$0xff]
    %v207 = vld [vmem:[%s5 + $0x8] sm:$0xff]
    %v208 = vld [vmem:[%s5 + $0x10] sm:$0xff]
    %v209 = vld [vmem:[%s5 + $0x18] sm:$0xff]
    %v210 = vld [vmem:[%s5 + $0x20] sm:$0xff]
    %v211 = vld [vmem:[%s5 + $0x28] sm:$0xff]
    %v212 = vld [vmem:[%s5 + $0x30] sm:$0xff]
    %v213 = vld [vmem:[%s5 + $0x38] sm:$0xff]
    %v214 = vld [vmem:[%s5 + $0x40] sm:$0xff]
    %v215 = vld [vmem:[%s5 + $0x48] sm:$0xff]
    %v216 = vld [vmem:[%s5 + $0x50] sm:$0xff]
    %v217 = vld [vmem:[%s5 + $0x58] sm:$0xff]
    %v218 = vld [vmem:[%s6] sm:$0x1]
    %v220 = vlaneseq
    %v221 = vshrl.u32 %v220, 7
    %v222 = vsub.s32 0, %v221
    %v223 = vrot.slane %v218, %v222
    %v226 = vsel %vm131, %v205, 0
    %228 = vmatprep.subr.mxu0 0.0
    %229 = vmatpush1.msra.mxu0 0.0
    %230 = vmatprep.subr.mxu0 0.0
    %231 = vmatpush1.msra.mxu0 0.0
    %232 = vmatprep.subr.mxu0 0.0
    %233 = vmatpush1.msra.mxu0 0.0
    %234 = vmatprep.subr.mxu0 0.0
    %235 = vmatpush1.msra.mxu0 0.0
    %236 = vmatprep.subr.mxu0 0.0
    %237 = vmatpush1.msra.mxu0 %v217
    %238 = vmatprep.subr.mxu0 0.0
    %239 = vmatpush1.msra.mxu0 %v216
    %240 = vmatprep.subr.mxu0 0.0
    %241 = vmatpush1.msra.mxu0 %v215
    %242 = vmatprep.subr.mxu0 0.0
    %243 = vmatpush1.msra.mxu0 %v214
    %244 = vmatprep.subr.mxu0 0.0
    %245 = vmatpush1.msra.mxu0 %v213
    %246 = vmatprep.subr.mxu0 0.0
    %247 = vmatpush1.msra.mxu0 %v212
    %248 = vmatprep.subr.mxu0 0.0
    %249 = vmatpush1.msra.mxu0 %v211
    %250 = vmatprep.subr.mxu0 0.0
    %251 = vmatpush1.msra.mxu0 %v210
    %252 = vmatprep.subr.mxu0 0.0
    %253 = vmatpush1.msra.mxu0 %v209
    %254 = vmatprep.subr.mxu0 0.0
    %255 = vmatpush1.msra.mxu0 %v208
    %256 = vmatprep.subr.mxu0 0.0
    %257 = vmatpush1.msra.mxu0 %v207
    %258 = vmatprep.subr.mxu0 0.0
    %259 = vmatpush1.msra.mxu0 %v206
    %260 = vmatprep.subr.mxu0 0.0
    %261 = vmatpush2.msra.mxu0 0.0
    %262 = vmatprep.subr.mxu0 0.0
    %263 = vmatpush2.msra.mxu0 0.0
    %264 = vmatprep.subr.mxu0 0.0
    %265 = vmatpush2.msra.mxu0 0.0
    %266 = vmatprep.subr.mxu0 0.0
    %267 = vmatpush2.msra.mxu0 0.0
    %268 = vmatprep.subr.mxu0 0.0
    %269 = vmatpush2.msra.mxu0 0.0
    %270 = vmatprep.subr.mxu0 0.0
    %271 = vmatpush2.msra.mxu0 0.0
    %272 = vmatprep.subr.mxu0 0.0
    %273 = vmatpush2.msra.mxu0 0.0
    %274 = vmatprep.subr.mxu0 0.0
    %275 = vmatpush2.msra.mxu0 0.0
    %276 = vmatprep.subr.mxu0 0.0
    %277 = vmatpush2.msra.mxu0 0.0
    %278 = vmatprep.subr.mxu0 0.0
    %279 = vmatpush2.msra.mxu0 0.0
    %280 = vmatprep.subr.mxu0 0.0
    %281 = vmatpush2.msra.mxu0 0.0
    %282 = vmatprep.subr.mxu0 0.0
    %283 = vmatpush2.msra.mxu0 0.0
    %284 = vmatprep.subr.mxu0 0.0
    %285 = vmatpush2.msra.mxu0 0.0
    %286 = vmatprep.subr.mxu0 0.0
    %287 = vmatpush2.msra.mxu0 0.0
    %288 = vmatprep.subr.mxu0 0.0
    %289 = vmatpush2.msra.mxu0 0.0
    %290 = vmatprep.subr.mxu0 0.0
    %291 = vmatpush2.msra.mxu0 0.0
    %292 = vmatprep.mubr.f32.mxu0 0.0
    %293 = vmatmul.mubr.f32.gmra.mxu0 %v226
    %v294 = vpop.f32.mrf.mxu0
    %v295 = vadd.f32 %v223, %v294
    %v296 = vpop.f32.mrf.mxu0
    %297 = vdwg.mxu0
    %vm298 = vcmp.gt.f32.partialorder %v295, 20.0
    %v299 = vmin.f32 %v295, 20.0
    %v300 = vmul.f32 %v299, 1.442695
    %v301 = vpow.pop %v300
    %v302 = vadd.f32 %v301, 1.0
    %v303 = vlog2.pop %v302
    %v304 = vmul.f32 %v303, 0.6931472
    %v305 = vsel %vm298, %v295, %v304
    %v306 = vmul.f32 %v295, %v295
    %308 = vrot.lane.b32.xlu0 %v306, 12
    %v309 = vpop.permute.xlu0 %308
    %v311 = vadd.f32 %v305, %v309
    %v312 = vmul.f32 %v311, 0.33333334
    %314 = vrot.lane.b32.xlu0 %v312, 124
    %v315 = vpop.permute.xlu0 %314
    %v317 = vadd.f32 %v312, %v315
    %318 = vrot.lane.b32.xlu0 %v312, 120
    %v319 = vpop.permute.xlu0 %318
    %v321 = vadd.f32 %v317, %v319
    %322 = vst [vmem:[#allocation2] sm:$0xff] 0.0
    %vm323 = vcmask 31744
    %324 = vst.msk [vmem:[#allocation2] sm:$0xff] %vm323, %v295
    %326 = vrot.lane.b32.xlu0 %v321, 116
    %v327 = vpop.permute.xlu0 %326
    %vm329 = vcmask 64544
    %330 = vst.msk [vmem:[#allocation2] sm:$0xff] %vm329, %v327
    // Predicated region
    $region30: #{tpu_custom_call.1} parent=1 // pred_check
      _
    $region31: #{tpu_custom_call.1} parent=1 // pred_check_branch
      %332 = sbr.rel (0) target = $region33
    $region32: #{tpu_custom_call.1} parent=1 // pred_region
      %s334 = ssub.s32 128, 128
      %335 = vsyncadd [#allocation3], %s334
      %s337 = sshll.u32 [#allocation2], 4
      %s338 = int_to_ptr.vmem [resolvable:$true] %s337
      %340 = dma.vmem_to_hbm [thread:$0]  %s338, 128, %s7, [#allocation3]
    $region33: #{tpu_custom_call.1} parent=1 // pred_fallthru
      _
    // Predicated region
    $region34: #{tpu_custom_call.1} parent=1 // pred_check
      _
    $region35: #{tpu_custom_call.1} parent=1 // pred_check_branch
      %342 = sbr.rel (0) target = $region37
    $region36: #{tpu_custom_call.1} parent=1 // pred_region
      %343 = dma.done [#allocation3], 128
    $region37: #{tpu_custom_call.1} parent=1 // pred_fallthru
      _
    %344 = vsyncpa [#allocation3], 1

</llo_original>
